<compile_context>
chip_gen: v5e
topology: v5e:2x2
jax: 0.10.0
libtpu: 0.0.40
codegen_flags: <defaults>
</compile_context>

<pallas_src>
import functools

import jax
import jax.numpy as jnp
from jax.experimental import pallas as pl
from jax.experimental.pallas import tpu as pltpu

_EPS = 1e-12  # torch.nn.functional.normalize default eps


def _rmsnorm_kernel(g_ref, x_ref, o_ref, *, scale):
    # g_ref: (1,) f32 in SMEM (scalar prefetch); x_ref/o_ref: (tile_rows, D).
    x = x_ref[...].astype(jnp.float32)
    sumsq = jnp.sum(x * x, axis=-1, keepdims=True)            # (tile_rows, 1)
    # max(||x||, 1e-12) == sqrt(max(sumsq, 1e-24)); rsqrt runs on the EUP slot.
    # (1e-24 is a normal f32; any all-zero row stays finite and maps to 0.)
    inv = jax.lax.rsqrt(jnp.maximum(sumsq, _EPS * _EPS))       # (tile_rows, 1)
    gs = g_ref[0].astype(jnp.float32) * scale                  # scalar
    # One per-row factor, one broadcasted vmul per vreg.
    o_ref[...] = (x * (inv * gs)).astype(o_ref.dtype)


def _round_up(v, m):
    return ((v + m - 1) // m) * m


def rmsnorm(x, g, *, tile_rows=None):
    """x: (..., D), g: scalar parameter of shape (1,). Returns same shape/dtype as x."""
    orig_shape = x.shape
    orig_dtype = x.dtype
    D = orig_shape[-1]
    scale = float(D) ** 0.5

    rows = 1
    for s in orig_shape[:-1]:
        rows *= int(s)
    x2 = x.reshape(rows, D)

    itemsize = jnp.dtype(orig_dtype).itemsize
    # Sublane packing: f32 -> 8, bf16 -> 16, int8/fp8 -> 32.
    row_align = max(8, 32 // itemsize)

    if tile_rows is None:
        # Per-buffer budget counted in 4-byte elements, independent of input
        # dtype (the kernel's f32 temporaries are the real VMEM consumer for
        # sub-32-bit inputs).  f32 input: ~6 MiB/tile -> ~24 MiB double-
        # buffered in+out; bf16: ~3 MiB/tile.  Comfortably under the 48 MiB
        # limit below and under v7x's 64 MiB physical VMEM.
        budget = 6 * 1024 * 1024
        tile_rows = max(row_align, budget // (D * 4))
        tile_rows = min(tile_rows, 8192)
        # Keep the grid at >= ~4 steps when rows allow, so both v7x
        # TensorCores get work ("parallel" row axis below).
        quarter = _round_up(pl.cdiv(rows, 4), row_align)
        tile_rows = min(tile_rows, max(row_align, quarter))
        tile_rows = max(row_align, (tile_rows // row_align) * row_align)

    # No row padding: last grid step handles a partial block (rows are
    # independent; OOB writes are masked).
    grid = (pl.cdiv(rows, tile_rows),)

    g_smem = jnp.asarray(g, dtype=jnp.float32).reshape(1)

    out = pl.pallas_call(
        functools.partial(_rmsnorm_kernel, scale=scale),
        out_shape=jax.ShapeDtypeStruct((rows, D), orig_dtype),
        grid_spec=pltpu.PrefetchScalarGridSpec(
            num_scalar_prefetch=1,  # g -> SMEM
            grid=grid,
            in_specs=[
                # Last block dim == full array dim, so any D is legal without
                # wrapper-side padding (tail stores are masked when D%128!=0).
                pl.BlockSpec((tile_rows, D), lambda i, g_ref: (i, 0)),
            ],
            out_specs=pl.BlockSpec((tile_rows, D), lambda i, g_ref: (i, 0)),
        ),
        compiler_params=pltpu.CompilerParams(
            dimension_semantics=("parallel",),        # row axis is embarrassingly parallel
            vmem_limit_bytes=48 * 1024 * 1024,        # above scoped defaults, headroom on v7x
        ),
    )(g_smem, x2)

    return out.reshape(orig_shape)


def _reference(x, g):
    xf = x.astype(jnp.float32)
    norm = jnp.sqrt(jnp.sum(xf * xf, axis=-1, keepdims=True))
    y = xf / jnp.maximum(norm, _EPS) * (x.shape[-1] ** 0.5) * g.reshape(())
    return y.astype(x.dtype)


if __name__ == "__main__":
    key = jax.random.PRNGKey(0)

    # Parameter init matches nn.Parameter(torch.ones(1))
    g = jnp.ones((1,), dtype=jnp.float32)

    # Main check: small shapes consistent with the module's usage.
    batch, seq, hidden = 2, 8, 32
    x = jax.random.normal(key, (batch, seq, hidden), dtype=jnp.float32)
    y = rmsnorm(x, g)
    jax.block_until_ready(y)
    ref = _reference(x, g)
    assert jnp.allclose(y, ref, atol=1e-5, rtol=1e-5), "mismatch vs reference (f32)"

    # Secondary check: rows that don't divide the tile and D % 128 != 0,
    # exercising the partial last block and masked tail-store paths.
    key2 = jax.random.PRNGKey(1)
    x2 = jax.random.normal(key2, (3, 5, 48), dtype=jnp.float32)
    y2 = rmsnorm(x2, g)
    jax.block_until_ready(y2)
    ref2 = _reference(x2, g)
    assert jnp.allclose(y2, ref2, atol=1e-5, rtol=1e-5), "mismatch vs reference (ragged)"

    print("KERNEL_OK")
</pallas_src>

<mosaic_0001>
module attributes {stable_mosaic.version = 11 : i64} {
  func.func @_rmsnorm_kernel(%arg0: i32, %arg1: memref<1xf32, #tpu.memory_space<smem>>, %arg2: memref<8x32xf32, #tpu.memory_space<vmem>>, %arg3: memref<8x32xf32, #tpu.memory_space<vmem>>) attributes {dimension_semantics = [#tpu.dimension_semantics<parallel>], iteration_bounds = array<i64: 2>, scalar_prefetch = 1 : i64, scratch_operands = 0 : i64, tpu.core_type = #tpu.core_type<tc>, window_params = [{transform_indices = @transform_0, window_bounds = array<i64: 8, 32>}, {transform_indices = @transform_1, window_bounds = array<i64: 8, 32>}]} {
    %c0 = arith.constant 0 : index
    %c0_0 = arith.constant 0 : index
    %0 = vector.load %arg2[%c0, %c0_0] : memref<8x32xf32, #tpu.memory_space<vmem>>, vector<8x32xf32>
    %1 = arith.mulf %0, %0 : vector<8x32xf32>
    %cst = arith.constant dense<0.000000e+00> : vector<8xf32>
    %2 = vector.multi_reduction <add>, %1, %cst [1] : vector<8x32xf32> to vector<8xf32>
    %3 = vector.shape_cast %2 : vector<8xf32> to vector<8x1xf32>
    %cst_1 = arith.constant 1.000000e-24 : f32
    %4 = vector.broadcast %cst_1 : f32 to vector<8x1xf32>
    %5 = arith.maximumf %3, %4 : vector<8x1xf32>
    %6 = math.rsqrt %5 : vector<8x1xf32>
    %c0_2 = arith.constant 0 : index
    %7 = memref.load %arg1[%c0_2] : memref<1xf32, #tpu.memory_space<smem>>
    %cst_3 = arith.constant 5.65685415 : f32
    %8 = arith.mulf %7, %cst_3 : f32
    %9 = vector.broadcast %8 : f32 to vector<8x1xf32>
    %10 = arith.mulf %6, %9 : vector<8x1xf32>
    %11 = vector.broadcast %10 : vector<8x1xf32> to vector<8x32xf32>
    %12 = arith.mulf %0, %11 : vector<8x32xf32>
    %c0_4 = arith.constant 0 : index
    %c0_5 = arith.constant 0 : index
    %13 = vector.load %arg3[%c0_4, %c0_5] : memref<8x32xf32, #tpu.memory_space<vmem>>, vector<8x32xf32>
    tpu.vector_store %arg3[%c0_4, %c0_5], %12 {strides = array<i32>} : memref<8x32xf32, #tpu.memory_space<vmem>>, vector<8x32xf32>,
    return
  }
  func.func @transform_0(%arg0: i32, %arg1: memref<1xf32, #tpu.memory_space<smem>>) -> (i32, i32) {
    %c0_i32 = arith.constant 0 : i32
    %c0_i32_0 = arith.constant 0 : i32
    return %arg0, %c0_i32 : i32, i32
  }
  func.func @transform_1(%arg0: i32, %arg1: memref<1xf32, #tpu.memory_space<smem>>) -> (i32, i32) {
    %c0_i32 = arith.constant 0 : i32
    %c0_i32_0 = arith.constant 0 : i32
    return %arg0, %c0_i32 : i32, i32
  }
}

</mosaic_0001>

<llo_original>
// kernel: tpu_custom_call.1
$region0: #{tpu_custom_call.1}
  #allocation0 [shape = 'u32[]', space=smem, size = 0x4, offset = 0x4, fixed_abs, tag = 'smem constant byte address 0x4 - core index']
  #allocation1 [shape = 'u32[72,128]{1,0:T(1,128)}', space=vmem, size = 0x9000, scoped, tag = 'internal scratch']
  #allocation2 [shape = 's32[1]{0}', space=sflag, size = 0x4, scoped, tag = 'scoped memory for tpu_custom_call.1']
  #allocation3 [shape = 'f32[1]{0:T(128)S(6)}', space=smem, size = 0x200, scoped, tag = 'prefetched SMEM operand 0']
  %s0 = inlined_call_operand.<no memory space> [shape: f32[1], index: 0, kind: input, shape index: {}]
  %s1 = inlined_call_operand.hbm [shape: f32[16,32], index: 1, kind: input, shape index: {}]
  %s2 = inlined_call_operand.hbm [shape: f32[16,32], index: 2, kind: output, shape index: {}]
  %s3 = sld [smem:[#allocation0]]
  $region41: #{tpu_custom_call.1} parent=0
    _
  %s5 = ssub.s32 1, %s3
  %s6 = scalar_select 0, %s5, %s3
  %7 = sst [smem:[#allocation3]] %s0
  $region1: #{tpu_custom_call.1} parent=0
    #allocation4 [shape = 'u8[8192]{0}', space=vmem, size = 0x2000, scoped, tag = 'input window, operand 1']
    #allocation5 [shape = 's32[2]{0}', space=sflag, size = 0x8, scoped, tag = 'scoped memory for tpu_custom_call.1']
    #allocation6 [shape = 's32[2]{0}', space=sflag, size = 0x8, scoped, tag = 'scoped memory for tpu_custom_call.1']
    #allocation7 [shape = 'u8[8192]{0}', space=vmem, size = 0x2000, scoped, tag = 'output window, operand 0']
    %8 = vsyncpa [#allocation5], 0
    %s9 = scalar_lea.sflag [#allocation5], 1
    %10 = vsyncpa %s9, 0
    %11 = vsyncpa [#allocation6], 0
    %s12 = scalar_lea.sflag [#allocation6], 1
    %13 = vsyncpa %s12, 0
    loop: start=0, step=1, limit=4
    $region2: #{tpu_custom_call.1} parent=1 // loop_pre_header
      _
    $region3: #{tpu_custom_call.1} parent=1 // loop_header
      %s15 = sphi 0, %s19
      %p16 = scmp.ge.s32.totalorder %s15, 4
      %s25 = sphi 0, %s27
      %s28 = sphi 0, %s25
      %s29 = sphi 0, %s28
      %s45 = sphi 0, %s29
      %s51 = sphi 0, %s53
      %s54 = sphi 0, %s51
      %s55 = sphi 0, %s54
      %s71 = sphi 0, %s55
    $region4: #{tpu_custom_call.1} parent=1 // loop_header_branch
      %18 = sbr.rel (%p16) target = $region8
    $region5: #{tpu_custom_call.1} parent=1 // loop_body
      %s20 = ssub.s32 %s15, 1
      %s21 = ssub.s32 %s15, 2
      %s22 = sadd.s32 %s15, 1
      %s23 = ssub.s32 %s15, %s22
      %p24 = scmp.eq.s32.totalorder %s23, 0
      %s26 = sadd.s32 %s25, 1
      %s27 = scalar_select %p24, %s25, %s26
      %p30 = pneg %p24
      %p31 = scmp.eq.s32.totalorder %s15, 1
      %p32 = por %p30, %p31
      %p33 = scmp.ne.s32.totalorder %s25, %s28
      %p34 = scmp.eq.s32.totalorder %s15, 0
      %p35 = por %p33, %p34
      %p36 = scmp.ne.s32.totalorder %s25, %s28
      %p37 = scmp.eq.s32.totalorder %s20, 1
      %p38 = por %p36, %p37
      %p39 = scmp.ne.s32.totalorder %s28, %s29
      %p40 = scmp.eq.s32.totalorder %s20, 0
      %p41 = por %p39, %p40
      %p42 = scmp.ne.s32.totalorder %s28, %s29
      %p43 = scmp.eq.s32.totalorder %s21, 1
      %p44 = por %p42, %p43
      %p46 = scmp.ne.s32.totalorder %s29, %s45
      %p47 = scmp.eq.s32.totalorder %s21, 0
      %p48 = por %p46, %p47
      %s49 = ssub.s32 %s15, %s22
      %p50 = scmp.eq.s32.totalorder %s49, 0
      %s52 = sadd.s32 %s51, 1
      %s53 = scalar_select %p50, %s51, %s52
      %p56 = pneg %p50
      %p57 = scmp.eq.s32.totalorder %s15, 1
      %p58 = por %p56, %p57
      %p59 = scmp.ne.s32.totalorder %s51, %s54
      %p60 = scmp.eq.s32.totalorder %s15, 0
      %p61 = por %p59, %p60
      %p62 = scmp.ne.s32.totalorder %s51, %s54
      %p63 = scmp.eq.s32.totalorder %s20, 1
      %p64 = por %p62, %p63
      %p65 = scmp.ne.s32.totalorder %s54, %s55
      %p66 = scmp.eq.s32.totalorder %s20, 0
      %p67 = por %p65, %p66
      %p68 = scmp.ne.s32.totalorder %s54, %s55
      %p69 = scmp.eq.s32.totalorder %s21, 1
      %p70 = por %p68, %p69
      %p72 = scmp.ne.s32.totalorder %s55, %s71
      %p73 = scmp.eq.s32.totalorder %s21, 0
      %p74 = por %p72, %p73
      %p75 = scmp.le.s32.totalorder 1, %s15
      %p76 = scmp.lt.s32.totalorder %s15, 3
      %p77 = pnand %p75, %p76
      %p78 = pneg %p77
      // Predicated region
      $region9: #{tpu_custom_call.1} parent=5 // pred_check
        _
      $region10: #{tpu_custom_call.1} parent=5 // pred_check_branch
        %80 = sbr.rel (%p77) target = $region12
      $region11: #{tpu_custom_call.1} parent=5 // pred_region
        %s81 = ssub.s32 %s15, 1
      $region12: #{tpu_custom_call.1} parent=5 // pred_fallthru
        _
      %p82 = scmp.lt.s32.totalorder %s15, 2
      // Predicated region
      $region13: #{tpu_custom_call.1} parent=5 // pred_check
        %p83 = pneg %p82
      $region14: #{tpu_custom_call.1} parent=5 // pred_check_branch
        %85 = sbr.rel (%p83) target = $region16
      $region15: #{tpu_custom_call.1} parent=5 // pred_region
        // Predicated region
        $region17: #{tpu_custom_call.1} parent=15 // pred_check
          %p86 = pneg %p35
        $region18: #{tpu_custom_call.1} parent=15 // pred_check_branch
          %88 = sbr.rel (%p86) target = $region20
        $region19: #{tpu_custom_call.1} parent=15 // pred_region
          %s89 = sand.u32 %s25, 1
          %s90 = scalar_lea.sflag [#allocation5], %s89
          %s91 = sand.u32 %s25, 1
          %s92 = smul.addr %s91, 8
          %s93 = scalar_lea.vmem [#allocation4], %s92
          %95 = vsyncadd %s90, 0
          %s96 = smul.addr %s15, 8
          %s97 = scalar_lea.hbm %s1, %s96
          %s99 = sshll.u32 %s97, 4
          %s100 = int_to_ptr.hbm [resolvable:$true] %s99
          %s101 = sshll.u32 %s93, 4
          %s102 = int_to_ptr.vmem [resolvable:$true] %s101
          %104 = dma.hbm_to_vmem [thread:$0]  %s100, 128, %s102, %s90
        $region20: #{tpu_custom_call.1} parent=15 // pred_fallthru
          _
      $region16: #{tpu_custom_call.1} parent=5 // pred_fallthru
        _
      %p105 = scmp.le.s32.totalorder 1, %s15
      %p106 = scmp.lt.s32.totalorder %s15, 3
      %p107 = pnand %p105, %p106
      %p108 = pneg %p107
      // Predicated region
      $region21: #{tpu_custom_call.1} parent=5 // pred_check
        _
      $region22: #{tpu_custom_call.1} parent=5 // pred_check_branch
        %110 = sbr.rel (%p107) target = $region24
      $region23: #{tpu_custom_call.1} parent=5 // pred_region
        %s111 = ssub.s32 %s15, 1
        %s112 = sand.u32 %s28, 1
        %s113 = scalar_lea.sflag [#allocation5], %s112
        %s114 = sand.u32 %s28, 1
        %s115 = smul.addr %s114, 8
        %s116 = scalar_lea.vmem [#allocation4], %s115
        // Predicated region
        $region25: #{tpu_custom_call.1} parent=23 // pred_check
          %p117 = pneg %p41
        $region26: #{tpu_custom_call.1} parent=23 // pred_check_branch
          %119 = sbr.rel (%p117) target = $region28
        $region27: #{tpu_custom_call.1} parent=23 // pred_region
          %121 = dma.done %s113, 128
        $region28: #{tpu_custom_call.1} parent=23 // pred_fallthru
          _
        %s122 = sand.u32 %s28, 1
        %s123 = scalar_lea.sflag [#allocation5], %s122
        %s124 = sand.u32 %s28, 1
        %s125 = smul.addr %s124, 8
        %s126 = scalar_lea.vmem [#allocation4], %s125
        %p127 = pneg %p41
        %p128 = pneg %p38
        %p129 = pneg %p67
        %p130 = pneg %p64
        %s131 = sand.u32 %s54, 1
        %s132 = scalar_lea.sflag [#allocation6], %s131
        %s133 = sand.u32 %s54, 1
        %s134 = smul.addr %s133, 8
        %s135 = scalar_lea.vmem [#allocation7], %s134
        %v136 = vld [vmem:[%s116] sm:$0xff]
        %v137 = vmul.f32 %v136, %v136
        %vm138 = vcmask 261120
        %v139 = vsel %vm138, %v137, 0.0
        %140 = vadd.xlane.f32.xlu0 %v139
        %v141 = vpop.xlane.xlu0 %140
        %v142 = vmax.f32 %v141, 1e-24
        %v143 = vrsqrt.pop %v142
        %v144 = vmul.f32 %v143, %v142
        %v145 = vmul.f32 %v144, %v143
        %v146 = vmul.f32 0.5, %v145
        %v147 = vsub.f32 1.5, %v146
        %v148 = vmul.f32 %v143, %v147
        %vm149 = vweird.f32 %v142
        %vm150 = vweird.f32 %v143
        %vm151 = vmor %vm149, %vm150
        %v152 = vsel %vm151, %v143, %v148
        %s153 = sld [smem:[#allocation3]]
        %s154 = smul.f32 %s153, 5.656854
        %v155 = vstv %s154
        %v156 = vmul.f32 %v152, %v155
        %v157 = vmul.f32 %v136, %v156
        %158 = vst.msk [vmem:[%s135] sm:$0xff] %vm138, %v157
        %s159 = sand.u32 %s54, 1
        %s160 = scalar_lea.sflag [#allocation6], %s159
        %s161 = sand.u32 %s54, 1
        %s162 = smul.addr %s161, 8
        %s163 = scalar_lea.vmem [#allocation7], %s162
        // Predicated region
        $region29: #{tpu_custom_call.1} parent=23 // pred_check
          %p164 = pneg %p64
        $region30: #{tpu_custom_call.1} parent=23 // pred_check_branch
          %166 = sbr.rel (%p164) target = $region32
        $region31: #{tpu_custom_call.1} parent=23 // pred_region
          %168 = vsyncadd %s160, 0
          %s169 = smul.addr %s20, 8
          %s170 = scalar_lea.hbm %s2, %s169
          %s172 = sshll.u32 %s163, 4
          %s173 = int_to_ptr.vmem [resolvable:$true] %s172
          %s174 = sshll.u32 %s170, 4
          %s175 = int_to_ptr.hbm [resolvable:$true] %s174
          %177 = dma.vmem_to_hbm [thread:$0]  %s173, 128, %s175, %s160
        $region32: #{tpu_custom_call.1} parent=23 // pred_fallthru
          _
      $region24: #{tpu_custom_call.1} parent=5 // pred_fallthru
        _
      %p178 = scmp.le.s32.totalorder 2, %s15
      // Predicated region
      $region33: #{tpu_custom_call.1} parent=5 // pred_check
        %p179 = pneg %p178
      $region34: #{tpu_custom_call.1} parent=5 // pred_check_branch
        %181 = sbr.rel (%p179) target = $region36
      $region35: #{tpu_custom_call.1} parent=5 // pred_region
        %s182 = ssub.s32 %s15, 2
        // Predicated region
        $region37: #{tpu_custom_call.1} parent=35 // pred_check
          %p183 = pneg %p70
        $region38: #{tpu_custom_call.1} parent=35 // pred_check_branch
          %185 = sbr.rel (%p183) target = $region40
        $region39: #{tpu_custom_call.1} parent=35 // pred_region
          %s186 = sand.u32 %s55, 1
          %s187 = scalar_lea.sflag [#allocation6], %s186
          %s188 = sand.u32 %s55, 1
          %s189 = smul.addr %s188, 8
          %s190 = scalar_lea.vmem [#allocation7], %s189
          %192 = dma.done %s187, 128
        $region40: #{tpu_custom_call.1} parent=35 // pred_fallthru
          _
      $region36: #{tpu_custom_call.1} parent=5 // pred_fallthru
        _
    $region6: #{tpu_custom_call.1} parent=1 // loop_footer
      %s19 = sadd.s32 1, %s15
    $region7: #{tpu_custom_call.1} parent=1 // loop_footer_branch
      %14 = sbr.rel target = $region3
    $region8: #{tpu_custom_call.1} parent=1 // loop_exit
      _
    %193 = vsyncpa [#allocation5], 1
    %s194 = scalar_lea.sflag [#allocation5], 1
    %195 = vsyncpa %s194, 1
    %196 = vsyncpa [#allocation6], 1
    %s197 = scalar_lea.sflag [#allocation6], 1
    %198 = vsyncpa %s197, 1

</llo_original>
